<compile_context>
chip_gen: v7x
topology: tpu7x:2x2x1
jax: 0.10.0
libtpu: 0.0.40
codegen_flags: <defaults>
</compile_context>

<pallas_src>
from functools import partial

import jax
import jax.numpy as jnp
from jax import lax
from jax.experimental import pallas as pl
from jax.experimental.pallas import tpu as pltpu


def _pyconv2_fused_kernel(xs_ref, w_ref, gamma_ref, beta_ref, o_ref, *, eps):
    # xs_ref:    (5*C, M)  im2col tap-stacked input, M = N*H*W (lane-dense)
    # w_ref:     (O, 5*C)  combined tap-stacked dense weight (both conv branches)
    # gamma_ref: (O, 1)    BN weight
    # beta_ref:  (O, 1)    BN bias
    # o_ref:     (O, M)    ReLU(BN(conv(x))) flattened over (N, H, W)
    y = jnp.dot(w_ref[...], xs_ref[...], preferred_element_type=jnp.float32)  # (O, M)

    # Training-mode BatchNorm2d: per-channel batch mean / biased variance over (N,H,W).
    inv_m = 1.0 / y.shape[1]
    mean = jnp.sum(y, axis=1, keepdims=True) * inv_m            # (O, 1)
    centered = y - mean
    var = jnp.sum(centered * centered, axis=1, keepdims=True) * inv_m
    scale = gamma_ref[...] * lax.rsqrt(var + eps)               # (O, 1)
    o_ref[...] = jnp.maximum(centered * scale + beta_ref[...], 0.0).astype(o_ref.dtype)


def make_params(key, inplans, planes, groups2=4):
    O1 = planes // 2
    O2 = planes // 2
    k1, k2, k3, k4, k5, k6 = jax.random.split(key, 6)
    # PyTorch Conv2d weight shapes: (out, in // groups, kH, kW); kW = 1 is squeezed.
    w1 = 0.1 * jax.random.normal(k1, (O1, inplans, 3), jnp.float32)
    b1 = 0.1 * jax.random.normal(k2, (O1,), jnp.float32)
    w2g = 0.1 * jax.random.normal(k3, (O2, inplans // groups2, 5), jnp.float32)
    b2 = 0.1 * jax.random.normal(k4, (O2,), jnp.float32)
    gamma = 1.0 + 0.1 * jax.random.normal(k5, (planes,), jnp.float32)
    beta = 0.1 * jax.random.normal(k6, (planes,), jnp.float32)

    # Fold the grouped conv (groups=4) into a dense block-diagonal weight (exact).
    w2 = jnp.zeros((O2, inplans, 5), jnp.float32)
    og, cg = O2 // groups2, inplans // groups2
    for g in range(groups2):
        w2 = w2.at[g * og:(g + 1) * og, g * cg:(g + 1) * cg, :].set(
            w2g[g * og:(g + 1) * og])
    return w1, b1, w2, b2, gamma, beta


def pyconv2_forward(x, w1, b1, w2, b2, gamma, beta, eps=1e-5):
    # Conv biases b1/b2 are exactly cancelled by the training-mode BN mean
    # subtraction (constant per-channel shift), so they are not sent to the kernel.
    del b1, b2
    N, C, H, W = x.shape
    O1, O2 = w1.shape[0], w2.shape[0]
    O = O1 + O2
    M = N * H * W
    K = 5 * C

    # --- glue: im2col along H (pad 2 covers both the k=3/pad=1 and k=5/pad=2 taps) ---
    xp = jnp.pad(x, ((0, 0), (0, 0), (2, 2), (0, 0)))                 # (N, C, H+4, W)
    slabs = jnp.stack([xp[:, :, k:k + H, :] for k in range(5)], 0)    # (5, N, C, H, W)
    xs = slabs.transpose(0, 2, 1, 3, 4).reshape(K, M)                 # (5*C, N*H*W)

    # --- glue: tap-stacked combined weight; branch-1 (kernel 3) sits at taps 1..3 ---
    Wc = jnp.zeros((O, 5, C), jnp.float32)
    Wc = Wc.at[:O1, 1:4, :].set(jnp.transpose(w1, (0, 2, 1)))         # (O1, 3, C)
    Wc = Wc.at[O1:, :, :].set(jnp.transpose(w2, (0, 2, 1)))           # (O2, 5, C)
    Wc = Wc.reshape(O, K)

    out_flat = pl.pallas_call(
        partial(_pyconv2_fused_kernel, eps=eps),
        out_shape=jax.ShapeDtypeStruct((O, M), jnp.float32),
        grid=(1,),
        in_specs=[
            pl.BlockSpec((K, M), lambda i: (0, 0)),
            pl.BlockSpec((O, K), lambda i: (0, 0)),
            pl.BlockSpec((O, 1), lambda i: (0, 0)),
            pl.BlockSpec((O, 1), lambda i: (0, 0)),
        ],
        out_specs=pl.BlockSpec((O, M), lambda i: (0, 0)),
        compiler_params=pltpu.CompilerParams(
            dimension_semantics=("arbitrary",),
            vmem_limit_bytes=32 * 1024 * 1024,
        ),
    )(xs, Wc, gamma.reshape(O, 1), beta.reshape(O, 1))

    # (O, N*H*W) -> (N, O, H, W)
    return out_flat.reshape(O, N, H, W).transpose(1, 0, 2, 3)


def _reference(x, w1, b1, w2, b2, gamma, beta, eps=1e-5):
    # Pure-JAX reference with the original (unfused) structure, biases included.
    dn = ("NCHW", "OIHW", "NCHW")
    y1 = lax.conv_general_dilated(x, w1[..., None], (1, 1), ((1, 1), (0, 0)),
                                  dimension_numbers=dn,
                                  precision=lax.Precision.HIGHEST)
    y1 = y1 + b1.reshape(1, -1, 1, 1)
    y2 = lax.conv_general_dilated(x, w2[..., None], (1, 1), ((2, 2), (0, 0)),
                                  dimension_numbers=dn,
                                  precision=lax.Precision.HIGHEST)
    y2 = y2 + b2.reshape(1, -1, 1, 1)
    y = jnp.concatenate([y1, y2], axis=1)
    mean = y.mean(axis=(0, 2, 3), keepdims=True)
    var = y.var(axis=(0, 2, 3), keepdims=True)
    yn = (y - mean) / jnp.sqrt(var + eps) * gamma.reshape(1, -1, 1, 1) \
        + beta.reshape(1, -1, 1, 1)
    return jnp.maximum(yn, 0.0)


if __name__ == "__main__":
    key = jax.random.PRNGKey(0)
    kx, kp = jax.random.split(key)

    # Small shapes consistent with the module: inplans=8, planes=16 (groups=4 divides both).
    N, inplans, planes, H, W = 2, 8, 16, 16, 16
    x = jax.random.normal(kx, (N, inplans, H, W), jnp.float32)
    params = make_params(kp, inplans, planes, groups2=4)

    y = pyconv2_forward(x, *params)
    jax.block_until_ready(y)

    assert y.shape == (N, planes, H, W)
    assert bool(jnp.all(jnp.isfinite(y))) and bool(jnp.all(y >= 0.0))

    y_ref = _reference(x, *params)
    max_err = float(jnp.max(jnp.abs(y - y_ref)))
    assert max_err < 5e-3, f"mismatch vs reference: {max_err}"

    print("KERNEL_OK")
</pallas_src>

<mosaic_0001>
module attributes {stable_mosaic.version = 11 : i64} {
  func.func @_pyconv2_fused_kernel(%arg0: i32, %arg1: memref<40x512xf32, #tpu.memory_space<vmem>>, %arg2: memref<16x40xf32, #tpu.memory_space<vmem>>, %arg3: memref<16x1xf32, #tpu.memory_space<vmem>>, %arg4: memref<16x1xf32, #tpu.memory_space<vmem>>, %arg5: memref<16x512xf32, #tpu.memory_space<vmem>>) attributes {dimension_semantics = [#tpu.dimension_semantics<arbitrary>], iteration_bounds = array<i64: 1>, scalar_prefetch = 0 : i64, scratch_operands = 0 : i64, tpu.core_type = #tpu.core_type<tc>, window_params = [{pipeline_mode = #tpu.pipeline_mode<synchronous>, transform_indices = @transform_0, window_bounds = array<i64: 40, 512>}, {pipeline_mode = #tpu.pipeline_mode<synchronous>, transform_indices = @transform_1, window_bounds = array<i64: 16, 40>}, {pipeline_mode = #tpu.pipeline_mode<synchronous>, transform_indices = @transform_2, window_bounds = array<i64: 16, 1>}, {pipeline_mode = #tpu.pipeline_mode<synchronous>, transform_indices = @transform_3, window_bounds = array<i64: 16, 1>}, {pipeline_mode = #tpu.pipeline_mode<synchronous>, transform_indices = @transform_4, window_bounds = array<i64: 16, 512>}]} {
    %c0 = arith.constant 0 : index
    %c0_0 = arith.constant 0 : index
    %0 = vector.load %arg2[%c0, %c0_0] : memref<16x40xf32, #tpu.memory_space<vmem>>, vector<16x40xf32>
    %c0_1 = arith.constant 0 : index
    %c0_2 = arith.constant 0 : index
    %1 = vector.load %arg1[%c0_1, %c0_2] : memref<40x512xf32, #tpu.memory_space<vmem>>, vector<40x512xf32>
    %cst = arith.constant dense<0.000000e+00> : vector<16x512xf32>
    %2 = tpu.matmul %0, %1, %cst {dimension_numbers = #tpu.dot_dimension_numbers<[1], [0], [0], [1], [0, 0, 1, 1], [], []>} : vector<16x40xf32>, vector<40x512xf32>, vector<16x512xf32> -> vector<16x512xf32>
    %cst_3 = arith.constant dense<0.000000e+00> : vector<16xf32>
    %3 = vector.multi_reduction <add>, %2, %cst_3 [1] : vector<16x512xf32> to vector<16xf32>
    %4 = vector.shape_cast %3 : vector<16xf32> to vector<16x1xf32>
    %cst_4 = arith.constant 0.001953125 : f32
    %5 = vector.broadcast %cst_4 : f32 to vector<16x1xf32>
    %6 = arith.mulf %4, %5 : vector<16x1xf32>
    %7 = vector.broadcast %6 : vector<16x1xf32> to vector<16x512xf32>
    %8 = arith.subf %2, %7 : vector<16x512xf32>
    %9 = arith.mulf %8, %8 : vector<16x512xf32>
    %cst_5 = arith.constant dense<0.000000e+00> : vector<16xf32>
    %10 = vector.multi_reduction <add>, %9, %cst_5 [1] : vector<16x512xf32> to vector<16xf32>
    %11 = vector.shape_cast %10 : vector<16xf32> to vector<16x1xf32>
    %cst_6 = arith.constant 0.001953125 : f32
    %12 = vector.broadcast %cst_6 : f32 to vector<16x1xf32>
    %13 = arith.mulf %11, %12 : vector<16x1xf32>
    %c0_7 = arith.constant 0 : index
    %c0_8 = arith.constant 0 : index
    %14 = vector.load %arg3[%c0_7, %c0_8] : memref<16x1xf32, #tpu.memory_space<vmem>>, vector<16x1xf32>
    %cst_9 = arith.constant 9.99999974E-6 : f32
    %15 = vector.broadcast %cst_9 : f32 to vector<16x1xf32>
    %16 = arith.addf %13, %15 : vector<16x1xf32>
    %17 = math.rsqrt %16 : vector<16x1xf32>
    %18 = arith.mulf %14, %17 : vector<16x1xf32>
    %19 = vector.broadcast %18 : vector<16x1xf32> to vector<16x512xf32>
    %20 = arith.mulf %8, %19 : vector<16x512xf32>
    %c0_10 = arith.constant 0 : index
    %c0_11 = arith.constant 0 : index
    %21 = vector.load %arg4[%c0_10, %c0_11] : memref<16x1xf32, #tpu.memory_space<vmem>>, vector<16x1xf32>
    %22 = vector.broadcast %21 : vector<16x1xf32> to vector<16x512xf32>
    %23 = arith.addf %20, %22 : vector<16x512xf32>
    %cst_12 = arith.constant 0.000000e+00 : f32
    %24 = vector.broadcast %cst_12 : f32 to vector<16x512xf32>
    %25 = arith.maximumf %23, %24 : vector<16x512xf32>
    %c0_13 = arith.constant 0 : index
    %c0_14 = arith.constant 0 : index
    %26 = vector.load %arg5[%c0_13, %c0_14] : memref<16x512xf32, #tpu.memory_space<vmem>>, vector<16x512xf32>
    tpu.vector_store %arg5[%c0_13, %c0_14], %25 {strides = array<i32>} : memref<16x512xf32, #tpu.memory_space<vmem>>, vector<16x512xf32>,
    return
  }
  func.func @transform_0(%arg0: i32) -> (i32, i32) {
    %c0_i32 = arith.constant 0 : i32
    %c0_i32_0 = arith.constant 0 : i32
    %c0_i32_1 = arith.constant 0 : i32
    return %c0_i32, %c0_i32_0 : i32, i32
  }
  func.func @transform_1(%arg0: i32) -> (i32, i32) {
    %c0_i32 = arith.constant 0 : i32
    %c0_i32_0 = arith.constant 0 : i32
    %c0_i32_1 = arith.constant 0 : i32
    return %c0_i32, %c0_i32_0 : i32, i32
  }
  func.func @transform_2(%arg0: i32) -> (i32, i32) {
    %c0_i32 = arith.constant 0 : i32
    %c0_i32_0 = arith.constant 0 : i32
    %c0_i32_1 = arith.constant 0 : i32
    return %c0_i32, %c0_i32_0 : i32, i32
  }
  func.func @transform_3(%arg0: i32) -> (i32, i32) {
    %c0_i32 = arith.constant 0 : i32
    %c0_i32_0 = arith.constant 0 : i32
    %c0_i32_1 = arith.constant 0 : i32
    return %c0_i32, %c0_i32_0 : i32, i32
  }
  func.func @transform_4(%arg0: i32) -> (i32, i32) {
    %c0_i32 = arith.constant 0 : i32
    %c0_i32_0 = arith.constant 0 : i32
    %c0_i32_1 = arith.constant 0 : i32
    return %c0_i32, %c0_i32_0 : i32, i32
  }
}

</mosaic_0001>

<llo_original>
// kernel: tpu_custom_call.1
$region0: #{tpu_custom_call.1}
  #allocation0 [shape = 'u32[]', space=smem, size = 0x4, offset = 0x4, fixed_abs, tag = 'smem constant byte address 0x4 - core index']
  #allocation1 [shape = 'u32[144,128]{1,0:T(1,128)}', space=vmem, size = 0x12000, scoped, tag = 'internal scratch']
  %s0 = inlined_call_operand.hbm [shape: f32[40,512], index: 0, kind: input, shape index: {}]
  %s1 = inlined_call_operand.vmem [shape: f32[16,40], index: 1, kind: input, shape index: {}]
  %s2 = inlined_call_operand.vmem [shape: f32[16,1], index: 2, kind: input, shape index: {}]
  %s3 = inlined_call_operand.vmem [shape: f32[16,1], index: 3, kind: input, shape index: {}]
  %s4 = inlined_call_operand.hbm [shape: f32[16,512], index: 4, kind: output, shape index: {}]
  %s5 = sld [smem:[#allocation0]]
  $region30: #{tpu_custom_call.1} parent=0
    _
  %s7 = ssub.s32 1, %s5
  %s8 = scalar_select 0, %s7, %s5
  $region1: #{tpu_custom_call.1} parent=0
    #allocation2 [shape = 'u8[81920]{0}', space=vmem, size = 0x14000, scoped, tag = 'input window, operand 0, single buffered']
    #allocation3 [shape = 's32[1]{0}', space=sflag, size = 0x4, scoped, tag = 'scoped memory for tpu_custom_call.1']
    #allocation4 [shape = 's32[1]{0}', space=sflag, size = 0x4, scoped, tag = 'scoped memory for tpu_custom_call.1']
    #allocation5 [shape = 'u8[32768]{0}', space=vmem, size = 0x8000, scoped, tag = 'output window, operand 0, single buffered']
    %9 = vsyncpa [#allocation3], 0
    %10 = vsyncpa [#allocation4], 0
    // Predicated region
    $region2: #{tpu_custom_call.1} parent=1 // pred_check
      _
    $region3: #{tpu_custom_call.1} parent=1 // pred_check_branch
      %12 = sbr.rel (0) target = $region5
    $region4: #{tpu_custom_call.1} parent=1 // pred_region
      %s14 = ssub.s32 2560, 2560
      %15 = vsyncadd [#allocation3], %s14
      %s16 = sshll.u32 [#allocation2], 4
      %s17 = int_to_ptr.vmem [resolvable:$true] %s16
      %22 = dma.hbm_to_vmem [thread:$0]  %s0, 2560, %s17, [#allocation3], 512, 512, 32
    $region5: #{tpu_custom_call.1} parent=1 // pred_fallthru
      _
    // Predicated region
    $region6: #{tpu_custom_call.1} parent=1 // pred_check
      _
    $region7: #{tpu_custom_call.1} parent=1 // pred_check_branch
      %24 = sbr.rel (0) target = $region9
    $region8: #{tpu_custom_call.1} parent=1 // pred_region
      _
    $region9: #{tpu_custom_call.1} parent=1 // pred_fallthru
      _
    // Predicated region
    $region10: #{tpu_custom_call.1} parent=1 // pred_check
      _
    $region11: #{tpu_custom_call.1} parent=1 // pred_check_branch
      %26 = sbr.rel (0) target = $region13
    $region12: #{tpu_custom_call.1} parent=1 // pred_region
      _
    $region13: #{tpu_custom_call.1} parent=1 // pred_fallthru
      _
    // Predicated region
    $region14: #{tpu_custom_call.1} parent=1 // pred_check
      _
    $region15: #{tpu_custom_call.1} parent=1 // pred_check_branch
      %28 = sbr.rel (0) target = $region17
    $region16: #{tpu_custom_call.1} parent=1 // pred_region
      _
    $region17: #{tpu_custom_call.1} parent=1 // pred_fallthru
      _
    // Predicated region
    $region18: #{tpu_custom_call.1} parent=1 // pred_check
      _
    $region19: #{tpu_custom_call.1} parent=1 // pred_check_branch
      %30 = sbr.rel (0) target = $region21
    $region20: #{tpu_custom_call.1} parent=1 // pred_region
      %31 = dma.done [#allocation3], 2560
    $region21: #{tpu_custom_call.1} parent=1 // pred_fallthru
      _
    %v32 = vld [vmem:[%s1] sm:$0xff]
    %v33 = vld [vmem:[%s1 + $0x8] sm:$0xff]
    %v34 = vld [vmem:[#allocation2] sm:$0xff]
    %v35 = vld [vmem:[#allocation2 + $0x8] sm:$0xff]
    %v36 = vld [vmem:[#allocation2 + $0x10] sm:$0xff]
    %v37 = vld [vmem:[#allocation2 + $0x18] sm:$0xff]
    %v38 = vld [vmem:[#allocation2 + $0x20] sm:$0xff]
    %v39 = vld [vmem:[#allocation2 + $0x28] sm:$0xff]
    %v40 = vld [vmem:[#allocation2 + $0x30] sm:$0xff]
    %v41 = vld [vmem:[#allocation2 + $0x38] sm:$0xff]
    %v42 = vld [vmem:[#allocation2 + $0x40] sm:$0xff]
    %v43 = vld [vmem:[#allocation2 + $0x48] sm:$0xff]
    %v44 = vld [vmem:[#allocation2 + $0x50] sm:$0xff]
    %v45 = vld [vmem:[#allocation2 + $0x58] sm:$0xff]
    %v46 = vld [vmem:[#allocation2 + $0x60] sm:$0xff]
    %v47 = vld [vmem:[#allocation2 + $0x68] sm:$0xff]
    %v48 = vld [vmem:[#allocation2 + $0x70] sm:$0xff]
    %v49 = vld [vmem:[#allocation2 + $0x78] sm:$0xff]
    %v50 = vld [vmem:[#allocation2 + $0x80] sm:$0xff]
    %v51 = vld [vmem:[#allocation2 + $0x88] sm:$0xff]
    %v52 = vld [vmem:[#allocation2 + $0x90] sm:$0xff]
    %v53 = vld [vmem:[#allocation2 + $0x98] sm:$0xff]
    %vm54 = vcmask 326656
    %v56 = vsel %vm54, %v32, 0
    %v59 = vsel %vm54, %v33, 0
    %61 = vmatprep.subr.mxu0 %v35
    %62 = vmatpush1.msra.mxu0 %v34
    %63 = vmatprep.subr.mxu0 %v39
    %64 = vmatpush1.msra.mxu0 %v38
    %65 = vmatprep.subr.mxu0 %v43
    %66 = vmatpush1.msra.mxu0 %v42
    %67 = vmatprep.subr.mxu0 %v47
    %68 = vmatpush1.msra.mxu0 %v46
    %69 = vmatprep.subr.mxu0 %v51
    %70 = vmatpush1.msra.mxu0 %v50
    %71 = vmatprep.subr.mxu0 0.0
    %72 = vmatpush1.msra.mxu0 0.0
    %73 = vmatprep.subr.mxu0 0.0
    %74 = vmatpush1.msra.mxu0 0.0
    %75 = vmatprep.subr.mxu0 0.0
    %76 = vmatpush1.msra.mxu0 0.0
    %77 = vmatprep.subr.mxu0 0.0
    %78 = vmatpush1.msra.mxu0 0.0
    %79 = vmatprep.subr.mxu0 0.0
    %80 = vmatpush1.msra.mxu0 0.0
    %81 = vmatprep.subr.mxu0 0.0
    %82 = vmatpush1.msra.mxu0 0.0
    %83 = vmatprep.subr.mxu0 0.0
    %84 = vmatpush1.msra.mxu0 0.0
    %85 = vmatprep.subr.mxu0 0.0
    %86 = vmatpush1.msra.mxu0 0.0
    %87 = vmatprep.subr.mxu0 0.0
    %88 = vmatpush1.msra.mxu0 0.0
    %89 = vmatprep.subr.mxu0 0.0
    %90 = vmatpush1.msra.mxu0 0.0
    %91 = vmatprep.subr.mxu0 0.0
    %92 = vmatpush1.msra.mxu0 0.0
    %93 = vmatprep.subr.mxu0 0.0
    %94 = vmatpush1.msra.mxu0 0.0
    %95 = vmatprep.subr.mxu0 0.0
    %96 = vmatpush1.msra.mxu0 0.0
    %97 = vmatprep.subr.mxu0 0.0
    %98 = vmatpush1.msra.mxu0 0.0
    %99 = vmatprep.subr.mxu0 0.0
    %100 = vmatpush1.msra.mxu0 0.0
    %101 = vmatprep.subr.mxu0 0.0
    %102 = vmatpush1.msra.mxu0 0.0
    %103 = vmatprep.subr.mxu0 0.0
    %104 = vmatpush1.msra.mxu0 0.0
    %105 = vmatprep.subr.mxu0 0.0
    %106 = vmatpush1.msra.mxu0 0.0
    %107 = vmatprep.subr.mxu0 0.0
    %108 = vmatpush1.msra.mxu0 0.0
    %109 = vmatprep.subr.mxu0 0.0
    %110 = vmatpush1.msra.mxu0 0.0
    %111 = vmatprep.subr.mxu0 0.0
    %112 = vmatpush1.msra.mxu0 0.0
    %113 = vmatprep.subr.mxu0 0.0
    %114 = vmatpush1.msra.mxu0 0.0
    %115 = vmatprep.subr.mxu0 0.0
    %116 = vmatpush1.msra.mxu0 0.0
    %117 = vmatprep.subr.mxu0 0.0
    %118 = vmatpush1.msra.mxu0 0.0
    %119 = vmatprep.subr.mxu0 0.0
    %120 = vmatpush1.msra.mxu0 0.0
    %121 = vmatprep.subr.mxu0 0.0
    %122 = vmatpush1.msra.mxu0 0.0
    %123 = vmatprep.subr.mxu0 0.0
    %124 = vmatpush1.msra.mxu0 0.0
    %125 = vmatprep.mubr.f32.mxu0 0.0
    %126 = vmatmul.mubr.f32.gmra.mrb[0].mxu0 %v56
    %v127 = vpop.f32.mrb[0].mxu0
    %v128 = vadd.f32 0.0, %v127
    %v129 = vpop.f32.mrb[0].mxu0
    %v130 = vadd.f32 0.0, %v129
    %131 = vmatprep.mubr.f32.mxu0 0.0
    %132 = vmatmul.mubr.f32.gmra.mrb[0].mxu0 %v59
    %v133 = vpop.f32.mrb[0].mxu0
    %v134 = vadd.f32 0.0, %v133
    %v135 = vpop.f32.mrb[0].mxu0
    %v136 = vadd.f32 0.0, %v135
    %137 = vdwg.mxu0
    %138 = vmatprep.subr.mxu0 %v37
    %139 = vmatpush1.msra.mxu0 %v36
    %140 = vmatprep.subr.mxu0 %v41
    %141 = vmatpush1.msra.mxu0 %v40
    %142 = vmatprep.subr.mxu0 %v45
    %143 = vmatpush1.msra.mxu0 %v44
    %144 = vmatprep.subr.mxu0 %v49
    %145 = vmatpush1.msra.mxu0 %v48
    %146 = vmatprep.subr.mxu0 %v53
    %147 = vmatpush1.msra.mxu0 %v52
    %148 = vmatprep.subr.mxu0 0.0
    %149 = vmatpush1.msra.mxu0 0.0
    %150 = vmatprep.subr.mxu0 0.0
    %151 = vmatpush1.msra.mxu0 0.0
    %152 = vmatprep.subr.mxu0 0.0
    %153 = vmatpush1.msra.mxu0 0.0
    %154 = vmatprep.subr.mxu0 0.0
    %155 = vmatpush1.msra.mxu0 0.0
    %156 = vmatprep.subr.mxu0 0.0
    %157 = vmatpush1.msra.mxu0 0.0
    %158 = vmatprep.subr.mxu0 0.0
    %159 = vmatpush1.msra.mxu0 0.0
    %160 = vmatprep.subr.mxu0 0.0
    %161 = vmatpush1.msra.mxu0 0.0
    %162 = vmatprep.subr.mxu0 0.0
    %163 = vmatpush1.msra.mxu0 0.0
    %164 = vmatprep.subr.mxu0 0.0
    %165 = vmatpush1.msra.mxu0 0.0
    %166 = vmatprep.subr.mxu0 0.0
    %167 = vmatpush1.msra.mxu0 0.0
    %168 = vmatprep.subr.mxu0 0.0
    %169 = vmatpush1.msra.mxu0 0.0
    %170 = vmatprep.subr.mxu0 0.0
    %171 = vmatpush1.msra.mxu0 0.0
    %172 = vmatprep.subr.mxu0 0.0
    %173 = vmatpush1.msra.mxu0 0.0
    %174 = vmatprep.subr.mxu0 0.0
    %175 = vmatpush1.msra.mxu0 0.0
    %176 = vmatprep.subr.mxu0 0.0
    %177 = vmatpush1.msra.mxu0 0.0
    %178 = vmatprep.subr.mxu0 0.0
    %179 = vmatpush1.msra.mxu0 0.0
    %180 = vmatprep.subr.mxu0 0.0
    %181 = vmatpush1.msra.mxu0 0.0
    %182 = vmatprep.subr.mxu0 0.0
    %183 = vmatpush1.msra.mxu0 0.0
    %184 = vmatprep.subr.mxu0 0.0
    %185 = vmatpush1.msra.mxu0 0.0
    %186 = vmatprep.subr.mxu0 0.0
    %187 = vmatpush1.msra.mxu0 0.0
    %188 = vmatprep.subr.mxu0 0.0
    %189 = vmatpush1.msra.mxu0 0.0
    %190 = vmatprep.subr.mxu0 0.0
    %191 = vmatpush1.msra.mxu0 0.0
    %192 = vmatprep.subr.mxu0 0.0
    %193 = vmatpush1.msra.mxu0 0.0
    %194 = vmatprep.subr.mxu0 0.0
    %195 = vmatpush1.msra.mxu0 0.0
    %196 = vmatprep.subr.mxu0 0.0
    %197 = vmatpush1.msra.mxu0 0.0
    %198 = vmatprep.subr.mxu0 0.0
    %199 = vmatpush1.msra.mxu0 0.0
    %200 = vmatprep.subr.mxu0 0.0
    %201 = vmatpush1.msra.mxu0 0.0
    %202 = vmatprep.mubr.f32.mxu0 0.0
    %203 = vmatmul.mubr.f32.gmra.mrb[0].mxu0 %v56
    %v204 = vpop.f32.mrb[0].mxu0
    %v205 = vadd.f32 0.0, %v204
    %v206 = vpop.f32.mrb[0].mxu0
    %v207 = vadd.f32 0.0, %v206
    %208 = vmatprep.mubr.f32.mxu0 0.0
    %209 = vmatmul.mubr.f32.gmra.mrb[0].mxu0 %v59
    %v210 = vpop.f32.mrb[0].mxu0
    %v211 = vadd.f32 0.0, %v210
    %v212 = vpop.f32.mrb[0].mxu0
    %v213 = vadd.f32 0.0, %v212
    %214 = vdwg.mxu0
    %v215 = vadd.f32 %v128, %v130
    %v216 = vadd.f32 %v215, %v205
    %v217 = vadd.f32 %v216, %v207
    %218 = vadd.xlane.f32.xlu0 %v217
    %v219 = vpop.xlane.xlu0 %218
    %v220 = vadd.f32 %v134, %v136
    %v221 = vadd.f32 %v220, %v211
    %v222 = vadd.f32 %v221, %v213
    %223 = vadd.xlane.f32.xlu0 %v222
    %v224 = vpop.xlane.xlu0 %223
    %v225 = vmul.f32 %v219, 0.001953125
    %v226 = vmul.f32 %v224, 0.001953125
    %v227 = vsub.f32 %v128, %v225
    %v228 = vsub.f32 %v130, %v225
    %v229 = vsub.f32 %v205, %v225
    %v230 = vsub.f32 %v207, %v225
    %v231 = vsub.f32 %v134, %v226
    %v232 = vsub.f32 %v136, %v226
    %v233 = vsub.f32 %v211, %v226
    %v234 = vsub.f32 %v213, %v226
    %v235 = vmul.f32 %v227, %v227
    %v236 = vmul.f32 %v228, %v228
    %v237 = vmul.f32 %v229, %v229
    %v238 = vmul.f32 %v230, %v230
    %v239 = vmul.f32 %v231, %v231
    %v240 = vmul.f32 %v232, %v232
    %v241 = vmul.f32 %v233, %v233
    %v242 = vmul.f32 %v234, %v234
    %v243 = vadd.f32 %v235, %v236
    %v244 = vadd.f32 %v243, %v237
    %v245 = vadd.f32 %v244, %v238
    %246 = vadd.xlane.f32.xlu0 %v245
    %v247 = vpop.xlane.xlu0 %246
    %v248 = vadd.f32 %v239, %v240
    %v249 = vadd.f32 %v248, %v241
    %v250 = vadd.f32 %v249, %v242
    %251 = vadd.xlane.f32.xlu0 %v250
    %v252 = vpop.xlane.xlu0 %251
    %v253 = vmul.f32 %v247, 0.001953125
    %v254 = vmul.f32 %v252, 0.001953125
    %v255 = vld [vmem:[%s2] sm:$0xff]
    %v256 = vld [vmem:[%s2 + $0x8] sm:$0xff]
    %v257 = vadd.f32 %v253, 1e-05
    %v258 = vadd.f32 %v254, 1e-05
    %v259 = vrsqrt.pop %v257
    %v260 = vrsqrt.pop %v258
    %v261 = vmul.f32 %v255, %v259
    %v262 = vmul.f32 %v256, %v260
    %264 = vset.pattern.permute.xlu0 0
    %265 = vperm.xlu0 %264, %v261
    %v266 = vpop.permute.xlu0 %265
    %269 = vset.pattern.permute.xlu0 0
    %270 = vperm.xlu0 %269, %v262
    %v271 = vpop.permute.xlu0 %270
    %v273 = vmul.f32 %v227, %v266
    %v274 = vmul.f32 %v228, %v266
    %v275 = vmul.f32 %v229, %v266
    %v276 = vmul.f32 %v230, %v266
    %v277 = vmul.f32 %v231, %v271
    %v278 = vmul.f32 %v232, %v271
    %v279 = vmul.f32 %v233, %v271
    %v280 = vmul.f32 %v234, %v271
    %v281 = vld [vmem:[%s3] sm:$0xff]
    %v282 = vld [vmem:[%s3 + $0x8] sm:$0xff]
    %284 = vset.pattern.permute.xlu0 0
    %285 = vperm.xlu0 %284, %v281
    %v286 = vpop.permute.xlu0 %285
    %289 = vset.pattern.permute.xlu0 0
    %290 = vperm.xlu0 %289, %v282
    %v291 = vpop.permute.xlu0 %290
    %v293 = vadd.f32 %v273, %v286
    %v294 = vadd.f32 %v274, %v286
    %v295 = vadd.f32 %v275, %v286
    %v296 = vadd.f32 %v276, %v286
    %v297 = vadd.f32 %v277, %v291
    %v298 = vadd.f32 %v278, %v291
    %v299 = vadd.f32 %v279, %v291
    %v300 = vadd.f32 %v280, %v291
    %v301 = vmax.f32 %v293, 0.0
    %v302 = vmax.f32 %v294, 0.0
    %v303 = vmax.f32 %v295, 0.0
    %v304 = vmax.f32 %v296, 0.0
    %v305 = vmax.f32 %v297, 0.0
    %v306 = vmax.f32 %v298, 0.0
    %v307 = vmax.f32 %v299, 0.0
    %v308 = vmax.f32 %v300, 0.0
    %309 = vst [vmem:[#allocation5] sm:$0xff] %v301
    %310 = vst [vmem:[#allocation5 + $0x8] sm:$0xff] %v302
    %311 = vst [vmem:[#allocation5 + $0x10] sm:$0xff] %v303
    %312 = vst [vmem:[#allocation5 + $0x18] sm:$0xff] %v304
    %313 = vst [vmem:[#allocation5 + $0x20] sm:$0xff] %v305
    %314 = vst [vmem:[#allocation5 + $0x28] sm:$0xff] %v306
    %315 = vst [vmem:[#allocation5 + $0x30] sm:$0xff] %v307
    %316 = vst [vmem:[#allocation5 + $0x38] sm:$0xff] %v308
    // Predicated region
    $region22: #{tpu_custom_call.1} parent=1 // pred_check
      _
    $region23: #{tpu_custom_call.1} parent=1 // pred_check_branch
      %318 = sbr.rel (0) target = $region25
    $region24: #{tpu_custom_call.1} parent=1 // pred_region
      %s320 = ssub.s32 1024, 1024
      %321 = vsyncadd [#allocation4], %s320
      %s322 = sshll.u32 [#allocation5], 4
      %s323 = int_to_ptr.vmem [resolvable:$true] %s322
      %328 = dma.vmem_to_hbm [thread:$0]  %s323, 1024, %s4, [#allocation4], 512, 512, 32
    $region25: #{tpu_custom_call.1} parent=1 // pred_fallthru
      _
    // Predicated region
    $region26: #{tpu_custom_call.1} parent=1 // pred_check
      _
    $region27: #{tpu_custom_call.1} parent=1 // pred_check_branch
      %330 = sbr.rel (0) target = $region29
    $region28: #{tpu_custom_call.1} parent=1 // pred_region
      %331 = dma.done [#allocation4], 1024
    $region29: #{tpu_custom_call.1} parent=1 // pred_fallthru
      _
    %332 = vsyncpa [#allocation3], 1
    %333 = vsyncpa [#allocation4], 1

</llo_original>
